<compile_context>
chip_gen: v6e
topology: v6e:2x2x1
jax: 0.10.0
libtpu: 0.0.40
codegen_flags: <defaults>
</compile_context>

<pallas_src>
import math

import jax
import jax.numpy as jnp
from jax.experimental import pallas as pl
from jax.experimental.pallas import tpu as pltpu

_LANE = 128


def _complex_relu_kernel(r_ref, i_ref, or_ref, oi_ref):
    # Elementwise ReLU on both parts (VPU); default double-buffering hides DMAs.
    or_ref[...] = jnp.maximum(r_ref[...], 0)
    oi_ref[...] = jnp.maximum(i_ref[...], 0)


def _device_params():
    """(block_rows, num_tensorcores) chosen per chip generation."""
    try:
        kind = jax.devices()[0].device_kind.lower()
    except Exception:
        kind = ""
    if "v5 lite" in kind or "v5lite" in kind or "v5e" in kind:
        # v5e: 16 MiB default scoped VMEM, ~0.82 TB/s HBM -> 1 MiB buffers fine.
        return 2048, 1
    if "v6" in kind:
        # v6e: 32 MiB scoped of 128 MiB physical -> 2 MiB buffers, 16 MiB total.
        return 4096, 1
    if "v7" in kind or "tpu7" in kind or " 7x" in kind:
        # v7x: 32 MiB scoped of 64 MiB physical, 2 TensorCores.
        return 4096, 2
    # Unknown chip: conservative.
    return 2048, 1


def _pick_block_rows(rows, block_rows, align, num_cores):
    """Sublane-packing-aligned block height; split only when >1 TensorCore."""
    if rows <= align:
        # Full-extent block along the row axis (allowed even when < align).
        return rows
    br = min(block_rows, rows)
    br -= br % align
    br = max(br, align)
    if num_cores >= 2 and pl.cdiv(rows, br) < num_cores:
        # Split so the "parallel" axis shards evenly across the TensorCores.
        br_even = pl.cdiv(pl.cdiv(rows, num_cores), align) * align
        br = max(align, min(br, br_even))
    return br


def complex_relu(input_r, input_i, *, block_rows=None, min_pallas_elems=1 << 16):
    """ReLU applied independently to the real and imaginary tensors."""
    assert input_r.shape == input_i.shape
    assert input_r.dtype == input_i.dtype
    orig_shape = input_r.shape
    dtype = input_r.dtype
    itemsize = jnp.dtype(dtype).itemsize
    total = math.prod(orig_shape) if orig_shape else 1

    # Small OR non-lane-aligned inputs: a fused XLA maximum is already at the
    # HBM roofline; a pad+slice-back Pallas path would add extra HBM passes.
    if total < min_pallas_elems or total % _LANE != 0:
        return jnp.maximum(input_r, 0), jnp.maximum(input_i, 0)

    dev_block_rows, num_cores = _device_params()
    if block_rows is None:
        block_rows = dev_block_rows

    # Sublane packing: 1 row/sublane for 32-bit, 2 for 16-bit, 4 for 8-bit.
    packing = max(1, 4 // itemsize)
    align = 8 * packing

    rows = total // _LANE
    br = _pick_block_rows(rows, block_rows, align, num_cores)
    grid = (pl.cdiv(rows, br),)  # Pallas masks a final partial block if any

    r2d = input_r.reshape(rows, _LANE)
    i2d = input_i.reshape(rows, _LANE)

    spec = pl.BlockSpec((br, _LANE), lambda i: (i, 0))

    out_r2d, out_i2d = pl.pallas_call(
        _complex_relu_kernel,
        out_shape=(
            jax.ShapeDtypeStruct((rows, _LANE), dtype),
            jax.ShapeDtypeStruct((rows, _LANE), dtype),
        ),
        grid_spec=pltpu.PrefetchScalarGridSpec(
            num_scalar_prefetch=0,
            grid=grid,
            in_specs=[spec, spec],
            out_specs=[spec, spec],
        ),
        compiler_params=pltpu.CompilerParams(
            dimension_semantics=("parallel",),
        ),
        cost_estimate=pl.CostEstimate(
            flops=2 * total,              # one max per element, two tensors
            transcendentals=0,
            bytes_accessed=4 * total * itemsize,  # 2 reads + 2 writes
        ),
    )(r2d, i2d)

    return out_r2d.reshape(orig_shape), out_i2d.reshape(orig_shape)


if __name__ == "__main__":
    key = jax.random.PRNGKey(0)
    kr, ki = jax.random.split(key)

    # Small NCHW shapes consistent with how complex conv nets use this module.
    x_r = jax.random.normal(kr, (2, 4, 16, 16), dtype=jnp.float32)
    x_i = jax.random.normal(ki, (2, 4, 16, 16), dtype=jnp.float32)
    ref_r = jnp.maximum(x_r, 0.0)
    ref_i = jnp.maximum(x_i, 0.0)

    # Force the Pallas path at this small (but 128-aligned) demo size so the
    # kernel itself runs: total=2048 -> rows=16 -> grid of 1 or 2 blocks.
    out_r, out_i = complex_relu(x_r, x_i, min_pallas_elems=0)
    jax.block_until_ready(out_r)
    jax.block_until_ready(out_i)
    assert out_r.shape == x_r.shape and out_i.shape == x_i.shape
    assert jnp.allclose(out_r, ref_r) and jnp.allclose(out_i, ref_i)

    # Default path (small-input fast path) must match too.
    fr, fi = complex_relu(x_r, x_i)
    assert jnp.allclose(fr, ref_r) and jnp.allclose(fi, ref_i)

    # Non-lane-aligned shape now routes through the fused-XLA fallback
    # (no pad/slice-back HBM passes); semantics must still match.
    kr2, ki2 = jax.random.split(jax.random.PRNGKey(0), 2)
    y_r = jax.random.normal(kr2, (3, 5, 7, 11), dtype=jnp.float32)
    y_i = jax.random.normal(ki2, (3, 5, 7, 11), dtype=jnp.float32)
    pr, pi = complex_relu(y_r, y_i, min_pallas_elems=0)
    jax.block_until_ready(pr)
    assert jnp.allclose(pr, jnp.maximum(y_r, 0.0))
    assert jnp.allclose(pi, jnp.maximum(y_i, 0.0))

    # bf16 input exercises the dtype-aware sublane alignment (align=16).
    b_r = x_r.astype(jnp.bfloat16)
    b_i = x_i.astype(jnp.bfloat16)
    br_, bi_ = complex_relu(b_r, b_i, min_pallas_elems=0)
    jax.block_until_ready(br_)
    assert jnp.allclose(br_, jnp.maximum(b_r, 0)) and jnp.allclose(bi_, jnp.maximum(b_i, 0))

    print("KERNEL_OK")
</pallas_src>

<mosaic_0001>
module attributes {stable_mosaic.version = 11 : i64} {
  func.func @_complex_relu_kernel(%arg0: i32, %arg1: memref<16x128xf32, #tpu.memory_space<vmem>>, %arg2: memref<16x128xf32, #tpu.memory_space<vmem>>, %arg3: memref<16x128xf32, #tpu.memory_space<vmem>>, %arg4: memref<16x128xf32, #tpu.memory_space<vmem>>) attributes {dimension_semantics = [#tpu.dimension_semantics<parallel>], iteration_bounds = array<i64: 1>, scalar_prefetch = 0 : i64, scratch_operands = 0 : i64, tpu.core_type = #tpu.core_type<tc>, window_params = [{transform_indices = @transform_0, window_bounds = array<i64: 16, 128>}, {transform_indices = @transform_1, window_bounds = array<i64: 16, 128>}, {transform_indices = @transform_2, window_bounds = array<i64: 16, 128>}, {transform_indices = @transform_3, window_bounds = array<i64: 16, 128>}]} {
    %c0 = arith.constant 0 : index
    %c0_0 = arith.constant 0 : index
    %0 = vector.load %arg1[%c0, %c0_0] : memref<16x128xf32, #tpu.memory_space<vmem>>, vector<16x128xf32>
    %cst = arith.constant 0.000000e+00 : f32
    %1 = vector.broadcast %cst : f32 to vector<16x128xf32>
    %2 = arith.maximumf %0, %1 : vector<16x128xf32>
    %c0_1 = arith.constant 0 : index
    %c0_2 = arith.constant 0 : index
    %3 = vector.load %arg3[%c0_1, %c0_2] : memref<16x128xf32, #tpu.memory_space<vmem>>, vector<16x128xf32>
    tpu.vector_store %arg3[%c0_1, %c0_2], %2 {strides = array<i32>} : memref<16x128xf32, #tpu.memory_space<vmem>>, vector<16x128xf32>,
    %c0_3 = arith.constant 0 : index
    %c0_4 = arith.constant 0 : index
    %4 = vector.load %arg2[%c0_3, %c0_4] : memref<16x128xf32, #tpu.memory_space<vmem>>, vector<16x128xf32>
    %cst_5 = arith.constant 0.000000e+00 : f32
    %5 = vector.broadcast %cst_5 : f32 to vector<16x128xf32>
    %6 = arith.maximumf %4, %5 : vector<16x128xf32>
    %c0_6 = arith.constant 0 : index
    %c0_7 = arith.constant 0 : index
    %7 = vector.load %arg4[%c0_6, %c0_7] : memref<16x128xf32, #tpu.memory_space<vmem>>, vector<16x128xf32>
    tpu.vector_store %arg4[%c0_6, %c0_7], %6 {strides = array<i32>} : memref<16x128xf32, #tpu.memory_space<vmem>>, vector<16x128xf32>,
    return
  }
  func.func @transform_0(%arg0: i32) -> (i32, i32) {
    %c0_i32 = arith.constant 0 : i32
    %c0_i32_0 = arith.constant 0 : i32
    return %arg0, %c0_i32 : i32, i32
  }
  func.func @transform_1(%arg0: i32) -> (i32, i32) {
    %c0_i32 = arith.constant 0 : i32
    %c0_i32_0 = arith.constant 0 : i32
    return %arg0, %c0_i32 : i32, i32
  }
  func.func @transform_2(%arg0: i32) -> (i32, i32) {
    %c0_i32 = arith.constant 0 : i32
    %c0_i32_0 = arith.constant 0 : i32
    return %arg0, %c0_i32 : i32, i32
  }
  func.func @transform_3(%arg0: i32) -> (i32, i32) {
    %c0_i32 = arith.constant 0 : i32
    %c0_i32_0 = arith.constant 0 : i32
    return %arg0, %c0_i32 : i32, i32
  }
}

</mosaic_0001>

<llo_original>
// kernel: tpu_custom_call.1
$region0: #{tpu_custom_call.1}
  #allocation0 [shape = 'u32[]', space=smem, size = 0x4, offset = 0x4, fixed_abs, tag = 'smem constant byte address 0x4 - core index']
  #allocation1 [shape = 'u32[144,128]{1,0:T(1,128)}', space=vmem, size = 0x12000, scoped, tag = 'internal scratch']
  %s0 = inlined_call_operand.hbm [shape: f32[16,128], index: 0, kind: input, shape index: {}]
  %s1 = inlined_call_operand.hbm [shape: f32[16,128], index: 1, kind: input, shape index: {}]
  %s2 = inlined_call_operand.hbm [shape: f32[16,128], index: 2, kind: output, shape index: {0}]
  %s3 = inlined_call_operand.hbm [shape: f32[16,128], index: 3, kind: output, shape index: {1}]
  %4 = xla_tuple %s2, %s3
  %s5 = sld [smem:[#allocation0]]
  $region34: #{tpu_custom_call.1} parent=0
    _
  %s7 = ssub.s32 1, %s5
  %s8 = scalar_select 0, %s7, %s5
  $region1: #{tpu_custom_call.1} parent=0
    #allocation2 [shape = 'u8[8192]{0}', space=vmem, size = 0x2000, scoped, tag = 'input window, operand 0, single buffered']
    #allocation3 [shape = 's32[1]{0}', space=sflag, size = 0x4, scoped, tag = 'scoped memory for tpu_custom_call.1']
    #allocation4 [shape = 's32[1]{0}', space=sflag, size = 0x4, scoped, tag = 'scoped memory for tpu_custom_call.1']
    #allocation5 [shape = 'u8[8192]{0}', space=vmem, size = 0x2000, scoped, tag = 'input window, operand 1, single buffered']
    #allocation6 [shape = 's32[1]{0}', space=sflag, size = 0x4, scoped, tag = 'scoped memory for tpu_custom_call.1']
    #allocation7 [shape = 'u8[8192]{0}', space=vmem, size = 0x2000, scoped, tag = 'output window, operand 0, single buffered']
    #allocation8 [shape = 'u8[8192]{0}', space=vmem, size = 0x2000, scoped, tag = 'output window, operand 1, single buffered']
    #allocation9 [shape = 's32[1]{0}', space=sflag, size = 0x4, scoped, tag = 'scoped memory for tpu_custom_call.1']
    %9 = vsyncpa [#allocation3], 0
    %10 = vsyncpa [#allocation6], 0
    %11 = vsyncpa [#allocation4], 0
    %12 = vsyncpa [#allocation9], 0
    // Predicated region
    $region2: #{tpu_custom_call.1} parent=1 // pred_check
      _
    $region3: #{tpu_custom_call.1} parent=1 // pred_check_branch
      %14 = sbr.rel (0) target = $region5
    $region4: #{tpu_custom_call.1} parent=1 // pred_region
      %s16 = ssub.s32 256, 256
      %17 = vsyncadd [#allocation3], %s16
      %s18 = sshll.u32 [#allocation2], 4
      %s19 = int_to_ptr.vmem [resolvable:$true] %s18
      %24 = dma.hbm_to_vmem [thread:$0]  %s0, 256, %s19, [#allocation3], 128, 128, 8
    $region5: #{tpu_custom_call.1} parent=1 // pred_fallthru
      _
    // Predicated region
    $region6: #{tpu_custom_call.1} parent=1 // pred_check
      _
    $region7: #{tpu_custom_call.1} parent=1 // pred_check_branch
      %26 = sbr.rel (0) target = $region9
    $region8: #{tpu_custom_call.1} parent=1 // pred_region
      %s28 = ssub.s32 256, 256
      %29 = vsyncadd [#allocation6], %s28
      %s30 = sshll.u32 [#allocation5], 4
      %s31 = int_to_ptr.vmem [resolvable:$true] %s30
      %36 = dma.hbm_to_vmem [thread:$0]  %s1, 256, %s31, [#allocation6], 128, 128, 8
    $region9: #{tpu_custom_call.1} parent=1 // pred_fallthru
      _
    // Predicated region
    $region10: #{tpu_custom_call.1} parent=1 // pred_check
      _
    $region11: #{tpu_custom_call.1} parent=1 // pred_check_branch
      %38 = sbr.rel (0) target = $region13
    $region12: #{tpu_custom_call.1} parent=1 // pred_region
      %39 = dma.done [#allocation3], 256
    $region13: #{tpu_custom_call.1} parent=1 // pred_fallthru
      _
    // Predicated region
    $region14: #{tpu_custom_call.1} parent=1 // pred_check
      _
    $region15: #{tpu_custom_call.1} parent=1 // pred_check_branch
      %41 = sbr.rel (0) target = $region17
    $region16: #{tpu_custom_call.1} parent=1 // pred_region
      %42 = dma.done [#allocation6], 256
    $region17: #{tpu_custom_call.1} parent=1 // pred_fallthru
      _
    %v43 = vld [vmem:[#allocation2] sm:$0xff]
    %v44 = vld [vmem:[#allocation2 + $0x8] sm:$0xff]
    %v45 = vmax.f32 %v43, 0.0
    %v46 = vmax.f32 %v44, 0.0
    %47 = vst [vmem:[#allocation7] sm:$0xff] %v45
    %48 = vst [vmem:[#allocation7 + $0x8] sm:$0xff] %v46
    %v49 = vld [vmem:[#allocation5] sm:$0xff]
    %v50 = vld [vmem:[#allocation5 + $0x8] sm:$0xff]
    %v51 = vmax.f32 %v49, 0.0
    %v52 = vmax.f32 %v50, 0.0
    %53 = vst [vmem:[#allocation8] sm:$0xff] %v51
    %54 = vst [vmem:[#allocation8 + $0x8] sm:$0xff] %v52
    // Predicated region
    $region18: #{tpu_custom_call.1} parent=1 // pred_check
      _
    $region19: #{tpu_custom_call.1} parent=1 // pred_check_branch
      %56 = sbr.rel (0) target = $region21
    $region20: #{tpu_custom_call.1} parent=1 // pred_region
      %s58 = ssub.s32 256, 256
      %59 = vsyncadd [#allocation4], %s58
      %s60 = sshll.u32 [#allocation7], 4
      %s61 = int_to_ptr.vmem [resolvable:$true] %s60
      %66 = dma.vmem_to_hbm [thread:$0]  %s61, 256, %s2, [#allocation4], 128, 128, 8
    $region21: #{tpu_custom_call.1} parent=1 // pred_fallthru
      _
    // Predicated region
    $region22: #{tpu_custom_call.1} parent=1 // pred_check
      _
    $region23: #{tpu_custom_call.1} parent=1 // pred_check_branch
      %68 = sbr.rel (0) target = $region25
    $region24: #{tpu_custom_call.1} parent=1 // pred_region
      %s70 = ssub.s32 256, 256
      %71 = vsyncadd [#allocation9], %s70
      %s72 = sshll.u32 [#allocation8], 4
      %s73 = int_to_ptr.vmem [resolvable:$true] %s72
      %78 = dma.vmem_to_hbm [thread:$0]  %s73, 256, %s3, [#allocation9], 128, 128, 8
    $region25: #{tpu_custom_call.1} parent=1 // pred_fallthru
      _
    // Predicated region
    $region26: #{tpu_custom_call.1} parent=1 // pred_check
      _
    $region27: #{tpu_custom_call.1} parent=1 // pred_check_branch
      %80 = sbr.rel (0) target = $region29
    $region28: #{tpu_custom_call.1} parent=1 // pred_region
      %81 = dma.done [#allocation4], 256
    $region29: #{tpu_custom_call.1} parent=1 // pred_fallthru
      _
    // Predicated region
    $region30: #{tpu_custom_call.1} parent=1 // pred_check
      _
    $region31: #{tpu_custom_call.1} parent=1 // pred_check_branch
      %83 = sbr.rel (0) target = $region33
    $region32: #{tpu_custom_call.1} parent=1 // pred_region
      %84 = dma.done [#allocation9], 256
    $region33: #{tpu_custom_call.1} parent=1 // pred_fallthru
      _
    %85 = vsyncpa [#allocation3], 1
    %86 = vsyncpa [#allocation6], 1
    %87 = vsyncpa [#allocation4], 1
    %88 = vsyncpa [#allocation9], 1

</llo_original>
